<compile_context>
chip_gen: v7x
topology: tpu7x:2x2x1
jax: 0.10.0
libtpu: 0.0.40
codegen_flags: <defaults>
</compile_context>

<pallas_src>
import jax
import jax.numpy as jnp
from jax.experimental import pallas as pl
from jax.experimental.pallas import tpu as pltpu


def a2c_kernel(x_ref, w1_ref, w2_ref, wh_ref, b_ref, out_ref):
    x = x_ref[...]                     # [TB, n_state] f32

    b1 = b_ref[0:1, :]                 # [1, 128]
    b2 = b_ref[1:2, 0:32]              # [1, 32]
    bh = b_ref[2:3, :]                 # [1, 128]

    # Layer 1: [TB, n_state] @ [n_state, 128] + b1 -> relu
    h1 = jnp.dot(x, w1_ref[...], preferred_element_type=jnp.float32) + b1
    h1 = jnp.maximum(h1, 0.0)

    # Layer 2: [TB, 128] @ [128, 32] + b2 -> relu
    h2 = jnp.dot(h1, w2_ref[...], preferred_element_type=jnp.float32) + b2
    h2 = jnp.maximum(h2, 0.0)

    # Fused heads: [TB, 32] @ [32, 128] + bh.
    #   lane 0: policy logit 0, lane 1: policy logit 1, lane 2: value, rest 0.
    heads = jnp.dot(h2, wh_ref[...], preferred_element_type=jnp.float32) + bh

    # Closed-form 2-class softmax (no cross-lane reductions).
    l0 = heads[:, 0:1]                 # [TB, 1]
    l1 = heads[:, 1:2]                 # [TB, 1]
    p0 = 1.0 / (1.0 + jnp.exp(l1 - l0))
    p1 = 1.0 - p0

    # Lane-dense [TB, 128] output slab: lanes 0/1 = probs, lane 2 = value
    # (lanes >= 3 carry the unused zero head columns; ignored by the wrapper).
    col = jax.lax.broadcasted_iota(jnp.int32, heads.shape, 1)
    out = jnp.where(col == 0, p0, jnp.where(col == 1, p1, heads))
    out_ref[...] = out.astype(out_ref.dtype)


def pack_params(p):
    """Pack per-layer PyTorch-style params into the kernel's fused operands."""
    wh = jnp.zeros((32, 128), jnp.float32)
    wh = wh.at[:, 0:2].set(p["wp"])          # policy weight columns
    wh = wh.at[:, 2:3].set(p["wv"])          # value weight column

    b = jnp.zeros((3, 128), jnp.float32)
    b = b.at[0, :].set(p["b1"][0])           # ln1 bias (128)
    b = b.at[1, 0:32].set(p["b2"][0])        # ln2 bias (32)
    b = b.at[2, 0:2].set(p["bp"][0])         # policy bias
    b = b.at[2, 2].set(p["bv"][0, 0])        # value bias

    return {"w1": p["w1"], "w2": p["w2"], "wh": wh, "b": b}


def a2c_forward(x, packed, *, block_b=None):
    """x: [B, n_state] f32.  packed: output of pack_params.

    Returns (probs [B, 2], value [B, 1]).
    """
    B, n_state = x.shape
    if block_b is None or B % block_b != 0:
        block_b = B                          # single batch tile
    grid = (B // block_b,)

    in_specs = [
        pl.BlockSpec((block_b, n_state), lambda i: (i, 0)),   # x
        pl.BlockSpec((n_state, 128), lambda i: (0, 0)),       # w1
        pl.BlockSpec((128, 32), lambda i: (0, 0)),            # w2
        pl.BlockSpec((32, 128), lambda i: (0, 0)),            # fused head weight
        pl.BlockSpec((3, 128), lambda i: (0, 0)),             # bias slab
    ]
    out_specs = pl.BlockSpec((block_b, 128), lambda i: (i, 0))

    out = pl.pallas_call(
        a2c_kernel,
        grid=grid,
        in_specs=in_specs,
        out_specs=out_specs,
        out_shape=jax.ShapeDtypeStruct((B, 128), jnp.float32),
        compiler_params=pltpu.CompilerParams(
            dimension_semantics=("parallel",)),   # shards batch tiles on v7x
    )(x, packed["w1"], packed["w2"], packed["wh"], packed["b"])

    probs = out[:, 0:2]
    value = out[:, 2:3]
    return probs, value


def init_params(key, n_state):
    """PyTorch-Linear-style init: U(-1/sqrt(fan_in), 1/sqrt(fan_in))."""
    def linear(key, fan_in, fan_out):
        kw, kb = jax.random.split(key)
        bound = 1.0 / jnp.sqrt(jnp.float32(fan_in))
        w = jax.random.uniform(kw, (fan_in, fan_out), jnp.float32, -bound, bound)
        b = jax.random.uniform(kb, (1, fan_out), jnp.float32, -bound, bound)
        return w, b

    k1, k2, k3, k4 = jax.random.split(key, 4)
    w1, b1 = linear(k1, n_state, 128)
    w2, b2 = linear(k2, 128, 32)
    wp, bp = linear(k3, 32, 2)
    wv, bv = linear(k4, 32, 1)
    return {"w1": w1, "b1": b1, "w2": w2, "b2": b2,
            "wp": wp, "bp": bp, "wv": wv, "bv": bv}


def a2c_reference(x, p):
    h1 = jnp.maximum(x @ p["w1"] + p["b1"], 0.0)
    h2 = jnp.maximum(h1 @ p["w2"] + p["b2"], 0.0)
    probs = jax.nn.softmax(h2 @ p["wp"] + p["bp"], axis=-1)
    v = h2 @ p["wv"] + p["bv"]
    return probs, v


if __name__ == "__main__":
    key = jax.random.PRNGKey(0)
    kx, kp = jax.random.split(key)

    B, n_state = 8, 4  # CartPole-like state dim
    x = jax.random.normal(kx, (B, n_state), jnp.float32)
    params = init_params(kp, n_state)
    packed = pack_params(params)

    probs, value = a2c_forward(x, packed)
    jax.block_until_ready((probs, value))

    probs_ref, value_ref = a2c_reference(x, params)
    assert probs.shape == (B, 2) and value.shape == (B, 1)
    assert jnp.allclose(probs, probs_ref, atol=1e-5, rtol=1e-5)
    assert jnp.allclose(value, value_ref, atol=1e-5, rtol=1e-5)
    assert jnp.allclose(jnp.sum(probs, axis=-1), 1.0, atol=1e-5)

    print("KERNEL_OK")
</pallas_src>

<mosaic_0001>
module attributes {stable_mosaic.version = 11 : i64} {
  func.func @a2c_kernel(%arg0: i32, %arg1: memref<8x4xf32, #tpu.memory_space<vmem>>, %arg2: memref<4x128xf32, #tpu.memory_space<vmem>>, %arg3: memref<128x32xf32, #tpu.memory_space<vmem>>, %arg4: memref<32x128xf32, #tpu.memory_space<vmem>>, %arg5: memref<3x128xf32, #tpu.memory_space<vmem>>, %arg6: memref<8x128xf32, #tpu.memory_space<vmem>>) attributes {dimension_semantics = [#tpu.dimension_semantics<parallel>], iteration_bounds = array<i64: 1>, scalar_prefetch = 0 : i64, scratch_operands = 0 : i64, tpu.core_type = #tpu.core_type<tc>, window_params = [{transform_indices = @transform_0, window_bounds = array<i64: 8, 4>}, {pipeline_mode = #tpu.pipeline_mode<synchronous>, transform_indices = @transform_1, window_bounds = array<i64: 4, 128>}, {pipeline_mode = #tpu.pipeline_mode<synchronous>, transform_indices = @transform_2, window_bounds = array<i64: 128, 32>}, {pipeline_mode = #tpu.pipeline_mode<synchronous>, transform_indices = @transform_3, window_bounds = array<i64: 32, 128>}, {pipeline_mode = #tpu.pipeline_mode<synchronous>, transform_indices = @transform_4, window_bounds = array<i64: 3, 128>}, {transform_indices = @transform_5, window_bounds = array<i64: 8, 128>}]} {
    %c0 = arith.constant 0 : index
    %c0_0 = arith.constant 0 : index
    %0 = vector.load %arg1[%c0, %c0_0] : memref<8x4xf32, #tpu.memory_space<vmem>>, vector<8x4xf32>
    %c0_1 = arith.constant 0 : index
    %c0_2 = arith.constant 0 : index
    %1 = vector.load %arg5[%c0_1, %c0_2] : memref<3x128xf32, #tpu.memory_space<vmem>>, vector<1x128xf32>
    %c1 = arith.constant 1 : index
    %c0_3 = arith.constant 0 : index
    %2 = vector.load %arg5[%c1, %c0_3] : memref<3x128xf32, #tpu.memory_space<vmem>>, vector<1x32xf32>
    %c2 = arith.constant 2 : index
    %c0_4 = arith.constant 0 : index
    %3 = vector.load %arg5[%c2, %c0_4] : memref<3x128xf32, #tpu.memory_space<vmem>>, vector<1x128xf32>
    %c0_5 = arith.constant 0 : index
    %c0_6 = arith.constant 0 : index
    %4 = vector.load %arg2[%c0_5, %c0_6] : memref<4x128xf32, #tpu.memory_space<vmem>>, vector<4x128xf32>
    %cst = arith.constant dense<0.000000e+00> : vector<8x128xf32>
    %5 = tpu.matmul %0, %4, %cst {dimension_numbers = #tpu.dot_dimension_numbers<[1], [0], [0], [1], [0, 0, 1, 1], [], []>} : vector<8x4xf32>, vector<4x128xf32>, vector<8x128xf32> -> vector<8x128xf32>
    %6 = vector.broadcast %1 : vector<1x128xf32> to vector<8x128xf32>
    %7 = arith.addf %5, %6 : vector<8x128xf32>
    %cst_7 = arith.constant 0.000000e+00 : f32
    %8 = vector.broadcast %cst_7 : f32 to vector<8x128xf32>
    %9 = arith.maximumf %7, %8 : vector<8x128xf32>
    %c0_8 = arith.constant 0 : index
    %c0_9 = arith.constant 0 : index
    %10 = vector.load %arg3[%c0_8, %c0_9] : memref<128x32xf32, #tpu.memory_space<vmem>>, vector<128x32xf32>
    %cst_10 = arith.constant dense<0.000000e+00> : vector<8x32xf32>
    %11 = tpu.matmul %9, %10, %cst_10 {dimension_numbers = #tpu.dot_dimension_numbers<[1], [0], [0], [1], [0, 0, 1, 1], [], []>} : vector<8x128xf32>, vector<128x32xf32>, vector<8x32xf32> -> vector<8x32xf32>
    %12 = vector.broadcast %2 : vector<1x32xf32> to vector<8x32xf32>
    %13 = arith.addf %11, %12 : vector<8x32xf32>
    %cst_11 = arith.constant 0.000000e+00 : f32
    %14 = vector.broadcast %cst_11 : f32 to vector<8x32xf32>
    %15 = arith.maximumf %13, %14 : vector<8x32xf32>
    %c0_12 = arith.constant 0 : index
    %c0_13 = arith.constant 0 : index
    %16 = vector.load %arg4[%c0_12, %c0_13] : memref<32x128xf32, #tpu.memory_space<vmem>>, vector<32x128xf32>
    %cst_14 = arith.constant dense<0.000000e+00> : vector<8x128xf32>
    %17 = tpu.matmul %15, %16, %cst_14 {dimension_numbers = #tpu.dot_dimension_numbers<[1], [0], [0], [1], [0, 0, 1, 1], [], []>} : vector<8x32xf32>, vector<32x128xf32>, vector<8x128xf32> -> vector<8x128xf32>
    %18 = vector.broadcast %3 : vector<1x128xf32> to vector<8x128xf32>
    %19 = arith.addf %17, %18 : vector<8x128xf32>
    %20 = vector.extract_strided_slice %19 {offsets = [0, 0], sizes = [8, 1], strides = [1, 1]} : vector<8x128xf32> to vector<8x1xf32>
    %21 = vector.extract_strided_slice %19 {offsets = [0, 1], sizes = [8, 1], strides = [1, 1]} : vector<8x128xf32> to vector<8x1xf32>
    %22 = arith.subf %21, %20 : vector<8x1xf32>
    %23 = math.exp %22 : vector<8x1xf32>
    %cst_15 = arith.constant 1.000000e+00 : f32
    %24 = vector.broadcast %cst_15 : f32 to vector<8x1xf32>
    %25 = arith.addf %24, %23 : vector<8x1xf32>
    %cst_16 = arith.constant 1.000000e+00 : f32
    %26 = vector.broadcast %cst_16 : f32 to vector<8x1xf32>
    %27 = arith.divf %26, %25 : vector<8x1xf32>
    %cst_17 = arith.constant 1.000000e+00 : f32
    %28 = vector.broadcast %cst_17 : f32 to vector<8x1xf32>
    %29 = arith.subf %28, %27 : vector<8x1xf32>
    %30 = tpu.iota {dimensions = array<i32: 1>} : vector<8x128xi32>
    %c0_i32 = arith.constant 0 : i32
    %31 = vector.broadcast %c0_i32 : i32 to vector<8x128xi32>
    %32 = arith.cmpi eq, %30, %31 : vector<8x128xi32>
    %c1_i32 = arith.constant 1 : i32
    %33 = vector.broadcast %c1_i32 : i32 to vector<8x128xi32>
    %34 = arith.cmpi eq, %30, %33 : vector<8x128xi32>
    %35 = vector.shape_cast %29 : vector<8x1xf32> to vector<8x1xf32>
    %36 = vector.broadcast %35 : vector<8x1xf32> to vector<8x128xf32>
    %37 = arith.select %34, %36, %19 : vector<8x128xi1>, vector<8x128xf32>
    %38 = vector.shape_cast %27 : vector<8x1xf32> to vector<8x1xf32>
    %39 = vector.broadcast %38 : vector<8x1xf32> to vector<8x128xf32>
    %40 = arith.select %32, %39, %37 : vector<8x128xi1>, vector<8x128xf32>
    %c0_18 = arith.constant 0 : index
    %c0_19 = arith.constant 0 : index
    %41 = vector.load %arg6[%c0_18, %c0_19] : memref<8x128xf32, #tpu.memory_space<vmem>>, vector<8x128xf32>
    tpu.vector_store %arg6[%c0_18, %c0_19], %40 {strides = array<i32>} : memref<8x128xf32, #tpu.memory_space<vmem>>, vector<8x128xf32>,
    return
  }
  func.func @transform_0(%arg0: i32) -> (i32, i32) {
    %c0_i32 = arith.constant 0 : i32
    %c0_i32_0 = arith.constant 0 : i32
    return %arg0, %c0_i32 : i32, i32
  }
  func.func @transform_1(%arg0: i32) -> (i32, i32) {
    %c0_i32 = arith.constant 0 : i32
    %c0_i32_0 = arith.constant 0 : i32
    %c0_i32_1 = arith.constant 0 : i32
    return %c0_i32, %c0_i32_0 : i32, i32
  }
  func.func @transform_2(%arg0: i32) -> (i32, i32) {
    %c0_i32 = arith.constant 0 : i32
    %c0_i32_0 = arith.constant 0 : i32
    %c0_i32_1 = arith.constant 0 : i32
    return %c0_i32, %c0_i32_0 : i32, i32
  }
  func.func @transform_3(%arg0: i32) -> (i32, i32) {
    %c0_i32 = arith.constant 0 : i32
    %c0_i32_0 = arith.constant 0 : i32
    %c0_i32_1 = arith.constant 0 : i32
    return %c0_i32, %c0_i32_0 : i32, i32
  }
  func.func @transform_4(%arg0: i32) -> (i32, i32) {
    %c0_i32 = arith.constant 0 : i32
    %c0_i32_0 = arith.constant 0 : i32
    %c0_i32_1 = arith.constant 0 : i32
    return %c0_i32, %c0_i32_0 : i32, i32
  }
  func.func @transform_5(%arg0: i32) -> (i32, i32) {
    %c0_i32 = arith.constant 0 : i32
    %c0_i32_0 = arith.constant 0 : i32
    return %arg0, %c0_i32 : i32, i32
  }
}

</mosaic_0001>

<llo_original>
// kernel: tpu_custom_call.1
$region0: #{tpu_custom_call.1}
  #allocation0 [shape = 'u32[]', space=smem, size = 0x4, offset = 0x4, fixed_abs, tag = 'smem constant byte address 0x4 - core index']
  #allocation1 [shape = 'u32[144,128]{1,0:T(1,128)}', space=vmem, size = 0x12000, scoped, tag = 'internal scratch']
  %s0 = inlined_call_operand.vmem [shape: f32[8,4], index: 0, kind: input, shape index: {}]
  %s1 = inlined_call_operand.vmem [shape: f32[4,128], index: 1, kind: input, shape index: {}]
  %s2 = inlined_call_operand.vmem [shape: f32[128,32], index: 2, kind: input, shape index: {}]
  %s3 = inlined_call_operand.vmem [shape: f32[32,128], index: 3, kind: input, shape index: {}]
  %s4 = inlined_call_operand.vmem [shape: f32[3,128], index: 4, kind: input, shape index: {}]
  %s5 = inlined_call_operand.hbm [shape: f32[8,128], index: 5, kind: output, shape index: {}]
  %s6 = sld [smem:[#allocation0]]
  $region30: #{tpu_custom_call.1} parent=0
    _
  %s8 = ssub.s32 1, %s6
  %s9 = scalar_select 0, %s8, %s6
  $region1: #{tpu_custom_call.1} parent=0
    #allocation2 [shape = 'u8[4096]{0}', space=vmem, size = 0x1000, scoped, tag = 'output window, operand 0, single buffered']
    #allocation3 [shape = 's32[1]{0}', space=sflag, size = 0x4, scoped, tag = 'scoped memory for tpu_custom_call.1']
    %10 = vsyncpa [#allocation3], 0
    // Predicated region
    $region2: #{tpu_custom_call.1} parent=1 // pred_check
      _
    $region3: #{tpu_custom_call.1} parent=1 // pred_check_branch
      %12 = sbr.rel (0) target = $region5
    $region4: #{tpu_custom_call.1} parent=1 // pred_region
      _
    $region5: #{tpu_custom_call.1} parent=1 // pred_fallthru
      _
    // Predicated region
    $region6: #{tpu_custom_call.1} parent=1 // pred_check
      _
    $region7: #{tpu_custom_call.1} parent=1 // pred_check_branch
      %14 = sbr.rel (0) target = $region9
    $region8: #{tpu_custom_call.1} parent=1 // pred_region
      _
    $region9: #{tpu_custom_call.1} parent=1 // pred_fallthru
      _
    // Predicated region
    $region10: #{tpu_custom_call.1} parent=1 // pred_check
      _
    $region11: #{tpu_custom_call.1} parent=1 // pred_check_branch
      %16 = sbr.rel (0) target = $region13
    $region12: #{tpu_custom_call.1} parent=1 // pred_region
      _
    $region13: #{tpu_custom_call.1} parent=1 // pred_fallthru
      _
    // Predicated region
    $region14: #{tpu_custom_call.1} parent=1 // pred_check
      _
    $region15: #{tpu_custom_call.1} parent=1 // pred_check_branch
      %18 = sbr.rel (0) target = $region17
    $region16: #{tpu_custom_call.1} parent=1 // pred_region
      _
    $region17: #{tpu_custom_call.1} parent=1 // pred_fallthru
      _
    // Predicated region
    $region18: #{tpu_custom_call.1} parent=1 // pred_check
      _
    $region19: #{tpu_custom_call.1} parent=1 // pred_check_branch
      %20 = sbr.rel (0) target = $region21
    $region20: #{tpu_custom_call.1} parent=1 // pred_region
      _
    $region21: #{tpu_custom_call.1} parent=1 // pred_fallthru
      _
    %v21 = vld [vmem:[%s0] sm:$0xff]
    %v22 = vld [vmem:[%s4] sm:$0x1]
    %v23 = vld [vmem:[%s4 + $0x1] sm:$0x1]
    %v24 = vld [vmem:[%s4 + $0x2] sm:$0x1]
    %v25 = vld [vmem:[%s1] sm:$0xf]
    %v26 = vlaneseq
    %v27 = vshrl.u32 %v26, 7
    %v28 = vsub.s32 0, %v27
    %v29 = vrot.slane %v22, %v28
    %vm30 = vcmask 31744
    %v32 = vsel %vm30, %v21, 0
    %vm34 = vcmask 1043456
    %v36 = vsel %vm34, %v25, 0
    %38 = vmatprep.subr.mxu0 0.0
    %39 = vmatpush1.msra.mxu0 %v36
    %40 = vmatprep.subr.mxu0 0.0
    %41 = vmatpush1.msra.mxu0 0.0
    %42 = vmatprep.subr.mxu0 0.0
    %43 = vmatpush1.msra.mxu0 0.0
    %44 = vmatprep.subr.mxu0 0.0
    %45 = vmatpush1.msra.mxu0 0.0
    %46 = vmatprep.subr.mxu0 0.0
    %47 = vmatpush1.msra.mxu0 0.0
    %48 = vmatprep.subr.mxu0 0.0
    %49 = vmatpush1.msra.mxu0 0.0
    %50 = vmatprep.subr.mxu0 0.0
    %51 = vmatpush1.msra.mxu0 0.0
    %52 = vmatprep.subr.mxu0 0.0
    %53 = vmatpush1.msra.mxu0 0.0
    %54 = vmatprep.subr.mxu0 0.0
    %55 = vmatpush1.msra.mxu0 0.0
    %56 = vmatprep.subr.mxu0 0.0
    %57 = vmatpush1.msra.mxu0 0.0
    %58 = vmatprep.subr.mxu0 0.0
    %59 = vmatpush1.msra.mxu0 0.0
    %60 = vmatprep.subr.mxu0 0.0
    %61 = vmatpush1.msra.mxu0 0.0
    %62 = vmatprep.subr.mxu0 0.0
    %63 = vmatpush1.msra.mxu0 0.0
    %64 = vmatprep.subr.mxu0 0.0
    %65 = vmatpush1.msra.mxu0 0.0
    %66 = vmatprep.subr.mxu0 0.0
    %67 = vmatpush1.msra.mxu0 0.0
    %68 = vmatprep.subr.mxu0 0.0
    %69 = vmatpush1.msra.mxu0 0.0
    %70 = vmatprep.subr.mxu0 0.0
    %71 = vmatpush1.msra.mxu0 0.0
    %72 = vmatprep.subr.mxu0 0.0
    %73 = vmatpush1.msra.mxu0 0.0
    %74 = vmatprep.subr.mxu0 0.0
    %75 = vmatpush1.msra.mxu0 0.0
    %76 = vmatprep.subr.mxu0 0.0
    %77 = vmatpush1.msra.mxu0 0.0
    %78 = vmatprep.subr.mxu0 0.0
    %79 = vmatpush1.msra.mxu0 0.0
    %80 = vmatprep.subr.mxu0 0.0
    %81 = vmatpush1.msra.mxu0 0.0
    %82 = vmatprep.subr.mxu0 0.0
    %83 = vmatpush1.msra.mxu0 0.0
    %84 = vmatprep.subr.mxu0 0.0
    %85 = vmatpush1.msra.mxu0 0.0
    %86 = vmatprep.subr.mxu0 0.0
    %87 = vmatpush1.msra.mxu0 0.0
    %88 = vmatprep.subr.mxu0 0.0
    %89 = vmatpush1.msra.mxu0 0.0
    %90 = vmatprep.subr.mxu0 0.0
    %91 = vmatpush1.msra.mxu0 0.0
    %92 = vmatprep.subr.mxu0 0.0
    %93 = vmatpush1.msra.mxu0 0.0
    %94 = vmatprep.subr.mxu0 0.0
    %95 = vmatpush1.msra.mxu0 0.0
    %96 = vmatprep.subr.mxu0 0.0
    %97 = vmatpush1.msra.mxu0 0.0
    %98 = vmatprep.subr.mxu0 0.0
    %99 = vmatpush1.msra.mxu0 0.0
    %100 = vmatprep.subr.mxu0 0.0
    %101 = vmatpush1.msra.mxu0 0.0
    %102 = vmatprep.mubr.f32.mxu0 0.0
    %103 = vmatmul.mubr.f32.gmra.mrb[0].mxu0 %v32
    %v104 = vpop.f32.mrb[0].mxu0
    %v105 = vadd.f32 %v29, %v104
    %v106 = vpop.f32.mrb[0].mxu0
    %107 = vdwg.mxu0
    %v108 = vmax.f32 %v105, 0.0
    %v109 = vld [vmem:[%s2] sm:$0xff]
    %v110 = vld [vmem:[%s2 + $0x8] sm:$0xff]
    %v111 = vld [vmem:[%s2 + $0x10] sm:$0xff]
    %v112 = vld [vmem:[%s2 + $0x18] sm:$0xff]
    %v113 = vld [vmem:[%s2 + $0x20] sm:$0xff]
    %v114 = vld [vmem:[%s2 + $0x28] sm:$0xff]
    %v115 = vld [vmem:[%s2 + $0x30] sm:$0xff]
    %v116 = vld [vmem:[%s2 + $0x38] sm:$0xff]
    %v117 = vld [vmem:[%s2 + $0x40] sm:$0xff]
    %v118 = vld [vmem:[%s2 + $0x48] sm:$0xff]
    %v119 = vld [vmem:[%s2 + $0x50] sm:$0xff]
    %v120 = vld [vmem:[%s2 + $0x58] sm:$0xff]
    %v121 = vld [vmem:[%s2 + $0x60] sm:$0xff]
    %v122 = vld [vmem:[%s2 + $0x68] sm:$0xff]
    %v123 = vld [vmem:[%s2 + $0x70] sm:$0xff]
    %v124 = vld [vmem:[%s2 + $0x78] sm:$0xff]
    %v125 = vlaneseq
    %v126 = vshrl.u32 %v125, 7
    %v127 = vsub.s32 0, %v126
    %v128 = vrot.slane %v23, %v127
    %129 = vmatprep.subr.mxu0 0.0
    %130 = vmatpush1.msra.mxu0 %v109
    %131 = vmatprep.subr.mxu0 0.0
    %132 = vmatpush1.msra.mxu0 %v110
    %133 = vmatprep.subr.mxu0 0.0
    %134 = vmatpush1.msra.mxu0 %v111
    %135 = vmatprep.subr.mxu0 0.0
    %136 = vmatpush1.msra.mxu0 %v112
    %137 = vmatprep.subr.mxu0 0.0
    %138 = vmatpush1.msra.mxu0 %v113
    %139 = vmatprep.subr.mxu0 0.0
    %140 = vmatpush1.msra.mxu0 %v114
    %141 = vmatprep.subr.mxu0 0.0
    %142 = vmatpush1.msra.mxu0 %v115
    %143 = vmatprep.subr.mxu0 0.0
    %144 = vmatpush1.msra.mxu0 %v116
    %145 = vmatprep.subr.mxu0 0.0
    %146 = vmatpush1.msra.mxu0 %v117
    %147 = vmatprep.subr.mxu0 0.0
    %148 = vmatpush1.msra.mxu0 %v118
    %149 = vmatprep.subr.mxu0 0.0
    %150 = vmatpush1.msra.mxu0 %v119
    %151 = vmatprep.subr.mxu0 0.0
    %152 = vmatpush1.msra.mxu0 %v120
    %153 = vmatprep.subr.mxu0 0.0
    %154 = vmatpush1.msra.mxu0 %v121
    %155 = vmatprep.subr.mxu0 0.0
    %156 = vmatpush1.msra.mxu0 %v122
    %157 = vmatprep.subr.mxu0 0.0
    %158 = vmatpush1.msra.mxu0 %v123
    %159 = vmatprep.subr.mxu0 0.0
    %160 = vmatpush1.msra.mxu0 %v124
    %161 = vmatprep.subr.mxu0 0.0
    %162 = vmatpush1.msra.mxu0 0.0
    %163 = vmatprep.subr.mxu0 0.0
    %164 = vmatpush1.msra.mxu0 0.0
    %165 = vmatprep.subr.mxu0 0.0
    %166 = vmatpush1.msra.mxu0 0.0
    %167 = vmatprep.subr.mxu0 0.0
    %168 = vmatpush1.msra.mxu0 0.0
    %169 = vmatprep.subr.mxu0 0.0
    %170 = vmatpush1.msra.mxu0 0.0
    %171 = vmatprep.subr.mxu0 0.0
    %172 = vmatpush1.msra.mxu0 0.0
    %173 = vmatprep.subr.mxu0 0.0
    %174 = vmatpush1.msra.mxu0 0.0
    %175 = vmatprep.subr.mxu0 0.0
    %176 = vmatpush1.msra.mxu0 0.0
    %177 = vmatprep.subr.mxu0 0.0
    %178 = vmatpush1.msra.mxu0 0.0
    %179 = vmatprep.subr.mxu0 0.0
    %180 = vmatpush1.msra.mxu0 0.0
    %181 = vmatprep.subr.mxu0 0.0
    %182 = vmatpush1.msra.mxu0 0.0
    %183 = vmatprep.subr.mxu0 0.0
    %184 = vmatpush1.msra.mxu0 0.0
    %185 = vmatprep.subr.mxu0 0.0
    %186 = vmatpush1.msra.mxu0 0.0
    %187 = vmatprep.subr.mxu0 0.0
    %188 = vmatpush1.msra.mxu0 0.0
    %189 = vmatprep.subr.mxu0 0.0
    %190 = vmatpush1.msra.mxu0 0.0
    %191 = vmatprep.subr.mxu0 0.0
    %192 = vmatpush1.msra.mxu0 0.0
    %193 = vmatprep.mubr.f32.mxu0 0.0
    %194 = vmatmul.mubr.f32.gmra.mrb[0].mxu0 %v108
    %v195 = vpop.f32.mrb[0].mxu0
    %v196 = vadd.f32 %v128, %v195
    %v197 = vpop.f32.mrb[0].mxu0
    %198 = vdwg.mxu0
    %v199 = vmax.f32 %v196, 0.0
    %v200 = vld [vmem:[%s3] sm:$0xff]
    %v201 = vld [vmem:[%s3 + $0x8] sm:$0xff]
    %v202 = vld [vmem:[%s3 + $0x10] sm:$0xff]
    %v203 = vld [vmem:[%s3 + $0x18] sm:$0xff]
    %v204 = vlaneseq
    %v205 = vshrl.u32 %v204, 7
    %v206 = vsub.s32 0, %v205
    %v207 = vrot.slane %v24, %v206
    %vm208 = vcmask 261120
    %v210 = vsel %vm208, %v199, 0
    %212 = vmatprep.subr.mxu0 0.0
    %213 = vmatpush1.msra.mxu0 %v200
    %214 = vmatprep.subr.mxu0 0.0
    %215 = vmatpush1.msra.mxu0 %v201
    %216 = vmatprep.subr.mxu0 0.0
    %217 = vmatpush1.msra.mxu0 %v202
    %218 = vmatprep.subr.mxu0 0.0
    %219 = vmatpush1.msra.mxu0 %v203
    %220 = vmatprep.subr.mxu0 0.0
    %221 = vmatpush1.msra.mxu0 0.0
    %222 = vmatprep.subr.mxu0 0.0
    %223 = vmatpush1.msra.mxu0 0.0
    %224 = vmatprep.subr.mxu0 0.0
    %225 = vmatpush1.msra.mxu0 0.0
    %226 = vmatprep.subr.mxu0 0.0
    %227 = vmatpush1.msra.mxu0 0.0
    %228 = vmatprep.subr.mxu0 0.0
    %229 = vmatpush1.msra.mxu0 0.0
    %230 = vmatprep.subr.mxu0 0.0
    %231 = vmatpush1.msra.mxu0 0.0
    %232 = vmatprep.subr.mxu0 0.0
    %233 = vmatpush1.msra.mxu0 0.0
    %234 = vmatprep.subr.mxu0 0.0
    %235 = vmatpush1.msra.mxu0 0.0
    %236 = vmatprep.subr.mxu0 0.0
    %237 = vmatpush1.msra.mxu0 0.0
    %238 = vmatprep.subr.mxu0 0.0
    %239 = vmatpush1.msra.mxu0 0.0
    %240 = vmatprep.subr.mxu0 0.0
    %241 = vmatpush1.msra.mxu0 0.0
    %242 = vmatprep.subr.mxu0 0.0
    %243 = vmatpush1.msra.mxu0 0.0
    %244 = vmatprep.subr.mxu0 0.0
    %245 = vmatpush1.msra.mxu0 0.0
    %246 = vmatprep.subr.mxu0 0.0
    %247 = vmatpush1.msra.mxu0 0.0
    %248 = vmatprep.subr.mxu0 0.0
    %249 = vmatpush1.msra.mxu0 0.0
    %250 = vmatprep.subr.mxu0 0.0
    %251 = vmatpush1.msra.mxu0 0.0
    %252 = vmatprep.subr.mxu0 0.0
    %253 = vmatpush1.msra.mxu0 0.0
    %254 = vmatprep.subr.mxu0 0.0
    %255 = vmatpush1.msra.mxu0 0.0
    %256 = vmatprep.subr.mxu0 0.0
    %257 = vmatpush1.msra.mxu0 0.0
    %258 = vmatprep.subr.mxu0 0.0
    %259 = vmatpush1.msra.mxu0 0.0
    %260 = vmatprep.subr.mxu0 0.0
    %261 = vmatpush1.msra.mxu0 0.0
    %262 = vmatprep.subr.mxu0 0.0
    %263 = vmatpush1.msra.mxu0 0.0
    %264 = vmatprep.subr.mxu0 0.0
    %265 = vmatpush1.msra.mxu0 0.0
    %266 = vmatprep.subr.mxu0 0.0
    %267 = vmatpush1.msra.mxu0 0.0
    %268 = vmatprep.subr.mxu0 0.0
    %269 = vmatpush1.msra.mxu0 0.0
    %270 = vmatprep.subr.mxu0 0.0
    %271 = vmatpush1.msra.mxu0 0.0
    %272 = vmatprep.subr.mxu0 0.0
    %273 = vmatpush1.msra.mxu0 0.0
    %274 = vmatprep.subr.mxu0 0.0
    %275 = vmatpush1.msra.mxu0 0.0
    %276 = vmatprep.mubr.f32.mxu0 0.0
    %277 = vmatmul.mubr.f32.gmra.mrb[0].mxu0 %v210
    %v278 = vpop.f32.mrb[0].mxu0
    %v279 = vadd.f32 %v207, %v278
    %v280 = vpop.f32.mrb[0].mxu0
    %281 = vdwg.mxu0
    %283 = vrot.lane.b32.xlu0 %v279, 1
    %v284 = vpop.permute.xlu0 %283
    %v286 = vsub.f32 %v279, %v284
    %v287 = vmul.f32 %v286, 1.442695
    %v288 = vpow.pop %v287
    %v289 = vadd.f32 %v288, 1.0
    %v290 = vrcp.pop %v289
    %v291 = vmul.f32 1.0, %v290
    %v292 = vsub.f32 1.0, %v291
    %v293 = vlaneseq
    %v294 = vand.u32 %v293, 127
    %vm295 = vcmp.eq.s32.totalorder %v294, 0
    %vm296 = vcmp.eq.s32.totalorder %v294, 1
    %298 = vset.pattern.permute.xlu0 1
    %299 = vperm.xlu0 %298, %v292
    %v300 = vpop.permute.xlu0 %299
    %v302 = vsel %vm296, %v300, %v279
    %304 = vset.pattern.permute.xlu0 1
    %305 = vperm.xlu0 %304, %v291
    %v306 = vpop.permute.xlu0 %305
    %v308 = vsel %vm295, %v306, %v302
    %309 = vst [vmem:[#allocation2] sm:$0xff] %v308
    // Predicated region
    $region22: #{tpu_custom_call.1} parent=1 // pred_check
      _
    $region23: #{tpu_custom_call.1} parent=1 // pred_check_branch
      %311 = sbr.rel (0) target = $region25
    $region24: #{tpu_custom_call.1} parent=1 // pred_region
      %s313 = ssub.s32 128, 128
      %314 = vsyncadd [#allocation3], %s313
      %s316 = sshll.u32 [#allocation2], 4
      %s317 = int_to_ptr.vmem [resolvable:$true] %s316
      %319 = dma.vmem_to_hbm [thread:$0]  %s317, 128, %s5, [#allocation3]
    $region25: #{tpu_custom_call.1} parent=1 // pred_fallthru
      _
    // Predicated region
    $region26: #{tpu_custom_call.1} parent=1 // pred_check
      _
    $region27: #{tpu_custom_call.1} parent=1 // pred_check_branch
      %321 = sbr.rel (0) target = $region29
    $region28: #{tpu_custom_call.1} parent=1 // pred_region
      %322 = dma.done [#allocation3], 128
    $region29: #{tpu_custom_call.1} parent=1 // pred_fallthru
      _
    %323 = vsyncpa [#allocation3], 1

</llo_original>
